<compile_context>
chip_gen: v5e
topology: v5e:2x2
jax: 0.10.0
libtpu: 0.0.40
codegen_flags: <defaults>
</compile_context>

<pallas_src>
import functools

import jax
import jax.numpy as jnp
import numpy as np
from jax.experimental import pallas as pl
from jax.experimental.pallas import tpu as pltpu


def _round_up(x: int, m: int) -> int:
    return (x + m - 1) // m * m


def _dwsep_kernel(x_ref, halo_ref, wf_ref, const_ref, out_ref, *, k: int, tl: int):
    # x_ref    : (C_in_p, TL)          -- main length tile of one batch element
    # halo_ref : (C_in_p, HW)          -- next HW columns of the padded input (right halo)
    # wf_ref   : (K, C_out_p, C_in_p)  -- folded depthwise*pointwise weights
    # const_ref: (C_out_p, 1)          -- bias constant (zeros if bias=False)
    # out_ref  : (C_out_p, TL)
    xp = jnp.concatenate([x_ref[...], halo_ref[...]], axis=-1)   # (C_in_p, TL + HW)
    # K accumulating MXU dots (statically unrolled); f32 accumulation.
    acc = jnp.dot(wf_ref[0], xp[:, :tl], preferred_element_type=jnp.float32)
    for t in range(1, k):
        acc = acc + jnp.dot(wf_ref[t], xp[:, t:t + tl],
                            preferred_element_type=jnp.float32)
    out_ref[...] = (acc + const_ref[...]).astype(out_ref.dtype)


def depthwise_separable_conv1d(x, w_dw, w_pw, const, *, kernel_size: int,
                               tl: int = 1024, mxu_dtype=None, input_buffers: int = 2):
    """x: (B, C_in, L). w_dw: (C_in, 1, K). w_pw: (C_out, C_in, 1). const: (C_out, 1).

    Returns (B, C_out, L_out) with L_out = L + 2*(K//2) - K + 1 (== L for odd K,
    == L+1 for even K), matching PyTorch Conv1d(padding=K//2) semantics.

    mxu_dtype: optionally cast MXU operands (recommended: jnp.bfloat16 on v5e/v6e/v7x);
    accumulation and output dtype stay f32. The folded weights round slightly
    differently from PyTorch's two-stage f32 conv in that mode.
    """
    B, C_in, L = x.shape
    C_out = w_pw.shape[0]
    K = kernel_size
    pad = K // 2
    L_out = L + 2 * pad - K + 1
    out_dtype = x.dtype

    # ---- cast FIRST so every later HBM pass (pad + kernel DMA) moves narrow data ----
    if mxu_dtype is not None:
        x = x.astype(mxu_dtype)
    act_dtype = x.dtype
    isz = jnp.dtype(act_dtype).itemsize
    osz = jnp.dtype(out_dtype).itemsize

    # dtype-aware sublane packing (f32: 8, bf16: 16, int8/fp8: 32)
    sub = 8 if isz >= 4 else (16 if isz == 2 else 32)
    C_in_p = _round_up(C_in, sub)
    C_out_p = _round_up(C_out, sub)

    # lane-aligned halo width (covers K-1 columns)
    HW = max(128, _round_up(max(K - 1, 1), 128))

    # lane-dense length tile, multiple of the halo width
    TL = _round_up(min(max(int(tl), 128), max(L_out, 1)), HW)

    # ---- generation-aware VMEM budget (64 MiB/TC on v7x, 128 MiB on v5e/v6e) ----
    cap = 64 * 1024 * 1024
    try:
        cap = int(getattr(pltpu.get_tpu_info(), "vmem_capacity_bytes", cap))
    except Exception:
        pass

    w_bytes = K * C_out_p * C_in_p * isz + C_out_p * 4

    def footprint(t):
        in_b = C_in_p * t * isz                  # main tile
        halo_b = C_in_p * HW * isz               # halo tile
        out_b = C_out_p * t * osz                # output tile
        tmp_b = (C_in_p * (t + HW) * isz         # concat temp
                 + 2 * C_out_p * t * 4           # accumulator + dot result
                 + 2 * C_in_p * t * isz)         # shifted MXU operands
        return 2 * (in_b + halo_b + out_b + w_bytes) + tmp_b

    budget = int(0.7 * cap)
    while footprint(TL) > budget and TL > HW:
        TL = max(HW, _round_up(TL // 2, HW))

    L_out_p = _round_up(L_out, TL)
    n_tiles = L_out_p // TL
    Lp_full = L_out_p + HW                       # padded input length (incl. halo tail)

    # Single padded activation array (conv pad left, conv/align/halo zeros right).
    x_pad = jnp.pad(x, ((0, 0), (0, C_in_p - C_in), (pad, Lp_full - pad - L)))

    # Folded weights: Wf[t, o, c] = w_pw[o, c] * w_dw[c, t]  (built once, tiny).
    w_dw2 = w_dw.reshape(C_in, K).astype(jnp.float32)
    w_pw2 = w_pw.reshape(C_out, C_in).astype(jnp.float32)
    wf = jnp.einsum('oc,ck->koc', w_pw2, w_dw2)                      # (K, C_out, C_in)
    wf = jnp.pad(wf, ((0, 0), (0, C_out_p - C_out), (0, C_in_p - C_in)))
    wf = wf.astype(act_dtype)

    const_p = jnp.pad(const.astype(jnp.float32), ((0, C_out_p - C_out), (0, 0)))

    needed = footprint(TL)
    vmem_limit = int(min(0.9 * cap, max(needed + (8 << 20), 32 << 20)))

    cost = pl.CostEstimate(
        flops=int(2 * B * n_tiles * K * C_out_p * C_in_p * TL),
        transcendentals=0,
        bytes_accessed=int(B * n_tiles * C_in_p * (TL + HW) * isz
                           + B * C_out_p * L_out_p * osz + w_bytes))

    # Two views of the SAME padded activation: main tile + lane-aligned right halo.
    main_spec = pl.BlockSpec((None, C_in_p, TL), lambda b, i: (b, 0, i))
    if input_buffers != 2:
        main_spec = pl.BlockSpec((None, C_in_p, TL), lambda b, i: (b, 0, i),
                                 pipeline_mode=pl.Buffered(input_buffers))
    halo_blocks = TL // HW
    halo_spec = pl.BlockSpec((None, C_in_p, HW),
                             lambda b, i: (b, 0, (i + 1) * halo_blocks))

    kernel = functools.partial(_dwsep_kernel, k=K, tl=TL)

    out_p = pl.pallas_call(
        kernel,
        out_shape=jax.ShapeDtypeStruct((B, C_out_p, L_out_p), out_dtype),
        grid_spec=pltpu.PrefetchScalarGridSpec(
            num_scalar_prefetch=0,
            grid=(B, n_tiles),
            in_specs=[
                main_spec,
                halo_spec,
                pl.BlockSpec((K, C_out_p, C_in_p), lambda b, i: (0, 0, 0)),
                pl.BlockSpec((C_out_p, 1), lambda b, i: (0, 0)),
            ],
            out_specs=pl.BlockSpec((None, C_out_p, TL), lambda b, i: (b, 0, i)),
        ),
        compiler_params=pltpu.CompilerParams(
            dimension_semantics=("parallel", "parallel"),
            vmem_limit_bytes=vmem_limit),
        cost_estimate=cost,
    )(x_pad, x_pad, wf, const_p)

    # Crop only when alignment padding was actually added (saves an HBM pass otherwise).
    if C_out_p != C_out or L_out_p != L_out:
        out_p = out_p[:, :C_out, :L_out]
    return out_p


def _reference(x, w_dw, w_pw, const, kernel_size):
    """Pure-JAX reference mirroring the PyTorch module."""
    pad = kernel_size // 2
    B, C_in, L = x.shape
    xp = jnp.pad(x, ((0, 0), (0, 0), (pad, pad)))
    L_out = L + 2 * pad - kernel_size + 1
    dw = jnp.zeros((B, C_in, L_out), x.dtype)
    for t in range(kernel_size):
        dw = dw + w_dw[:, 0, t][None, :, None] * xp[:, :, t:t + L_out]
    y = jnp.einsum('oc,bcl->bol', w_pw[:, :, 0], dw)
    return y + const[None, :, :]


if __name__ == "__main__":
    # --- case 1: toy shapes matching the module (bias=True) ---
    B, C_in, C_out, L, K = 2, 4, 8, 16, 3
    k1, k2, k3 = jax.random.split(jax.random.PRNGKey(0), 3)
    x = jax.random.normal(k1, (B, C_in, L), dtype=jnp.float32)
    w_dw = jax.random.normal(k2, (C_in, 1, K), dtype=jnp.float32) * 0.5
    w_pw = jax.random.normal(k3, (C_out, C_in, 1), dtype=jnp.float32) * 0.5
    const = jnp.ones((C_out, 1), jnp.float32) * np.log(1.0 / 0.07)

    out = jax.block_until_ready(
        depthwise_separable_conv1d(x, w_dw, w_pw, const, kernel_size=K))
    ref = _reference(x, w_dw, w_pw, const, K)
    np.testing.assert_allclose(np.asarray(out), np.asarray(ref), rtol=1e-5, atol=1e-5)

    # bf16 MXU fast path (valid on v5e/v6e/v7x) -- f32 accumulation, looser tolerance.
    out_bf16 = jax.block_until_ready(
        depthwise_separable_conv1d(x, w_dw, w_pw, const, kernel_size=K,
                                   mxu_dtype=jnp.bfloat16))
    np.testing.assert_allclose(np.asarray(out_bf16), np.asarray(ref),
                               rtol=5e-2, atol=5e-2)

    # --- case 2: unaligned channel counts + multiple length tiles (halo path, bias=False) ---
    B2, C_in2, C_out2, L2, K2 = 2, 10, 6, 300, 5
    k4, k5, k6 = jax.random.split(jax.random.PRNGKey(1), 3)
    x2 = jax.random.normal(k4, (B2, C_in2, L2), dtype=jnp.float32)
    w_dw_b = jax.random.normal(k5, (C_in2, 1, K2), dtype=jnp.float32) * 0.3
    w_pw_b = jax.random.normal(k6, (C_out2, C_in2, 1), dtype=jnp.float32) * 0.3
    const_b = jnp.zeros((C_out2, 1), jnp.float32)
    out2 = jax.block_until_ready(
        depthwise_separable_conv1d(x2, w_dw_b, w_pw_b, const_b,
                                   kernel_size=K2, tl=256))
    ref2 = _reference(x2, w_dw_b, w_pw_b, const_b, K2)
    np.testing.assert_allclose(np.asarray(out2), np.asarray(ref2), rtol=1e-5, atol=1e-5)

    print("KERNEL_OK")
</pallas_src>

<mosaic_0001>
module attributes {stable_mosaic.version = 11 : i64} {
  func.func @_dwsep_kernel(%arg0: i32, %arg1: i32, %arg2: memref<1x8x128xf32, #tpu.memory_space<vmem>>, %arg3: memref<1x8x128xf32, #tpu.memory_space<vmem>>, %arg4: memref<3x8x8xf32, #tpu.memory_space<vmem>>, %arg5: memref<8x1xf32, #tpu.memory_space<vmem>>, %arg6: memref<1x8x128xf32, #tpu.memory_space<vmem>>) attributes {dimension_semantics = [#tpu.dimension_semantics<parallel>, #tpu.dimension_semantics<parallel>], iteration_bounds = array<i64: 2, 1>, scalar_prefetch = 0 : i64, scratch_operands = 0 : i64, tpu.core_type = #tpu.core_type<tc>, window_params = [{transform_indices = @transform_0, window_bounds = array<i64: 1, 8, 128>}, {transform_indices = @transform_1, window_bounds = array<i64: 1, 8, 128>}, {pipeline_mode = #tpu.pipeline_mode<synchronous>, transform_indices = @transform_2, window_bounds = array<i64: 3, 8, 8>}, {pipeline_mode = #tpu.pipeline_mode<synchronous>, transform_indices = @transform_3, window_bounds = array<i64: 8, 1>}, {transform_indices = @transform_4, window_bounds = array<i64: 1, 8, 128>}]} {
    %c0 = arith.constant 0 : index
    %c0_0 = arith.constant 0 : index
    %c0_1 = arith.constant 0 : index
    %0 = vector.load %arg2[%c0, %c0_0, %c0_1] : memref<1x8x128xf32, #tpu.memory_space<vmem>>, vector<1x8x128xf32>
    %1 = vector.shape_cast %0 : vector<1x8x128xf32> to vector<8x128xf32>
    %c0_2 = arith.constant 0 : index
    %c0_3 = arith.constant 0 : index
    %c0_4 = arith.constant 0 : index
    %2 = vector.load %arg3[%c0_2, %c0_3, %c0_4] : memref<1x8x128xf32, #tpu.memory_space<vmem>>, vector<1x8x128xf32>
    %3 = vector.shape_cast %2 : vector<1x8x128xf32> to vector<8x128xf32>
    %4 = tpu.concatenate %1, %3 in 1 : vector<8x128xf32>, vector<8x128xf32> -> vector<8x256xf32>
    %c0_5 = arith.constant 0 : index
    %c0_6 = arith.constant 0 : index
    %c0_7 = arith.constant 0 : index
    %5 = vector.load %arg4[%c0_5, %c0_6, %c0_7] : memref<3x8x8xf32, #tpu.memory_space<vmem>>, vector<1x8x8xf32>
    %6 = vector.shape_cast %5 : vector<1x8x8xf32> to vector<8x8xf32>
    %7 = vector.extract_strided_slice %4 {offsets = [0, 0], sizes = [8, 128], strides = [1, 1]} : vector<8x256xf32> to vector<8x128xf32>
    %cst = arith.constant dense<0.000000e+00> : vector<8x128xf32>
    %8 = tpu.matmul %6, %7, %cst {dimension_numbers = #tpu.dot_dimension_numbers<[1], [0], [0], [1], [0, 0, 1, 1], [], []>} : vector<8x8xf32>, vector<8x128xf32>, vector<8x128xf32> -> vector<8x128xf32>
    %c1 = arith.constant 1 : index
    %c0_8 = arith.constant 0 : index
    %c0_9 = arith.constant 0 : index
    %9 = vector.load %arg4[%c1, %c0_8, %c0_9] : memref<3x8x8xf32, #tpu.memory_space<vmem>>, vector<1x8x8xf32>
    %10 = vector.shape_cast %9 : vector<1x8x8xf32> to vector<8x8xf32>
    %11 = vector.extract_strided_slice %4 {offsets = [0, 1], sizes = [8, 128], strides = [1, 1]} : vector<8x256xf32> to vector<8x128xf32>
    %cst_10 = arith.constant dense<0.000000e+00> : vector<8x128xf32>
    %12 = tpu.matmul %10, %11, %cst_10 {dimension_numbers = #tpu.dot_dimension_numbers<[1], [0], [0], [1], [0, 0, 1, 1], [], []>} : vector<8x8xf32>, vector<8x128xf32>, vector<8x128xf32> -> vector<8x128xf32>
    %13 = arith.addf %8, %12 : vector<8x128xf32>
    %c2 = arith.constant 2 : index
    %c0_11 = arith.constant 0 : index
    %c0_12 = arith.constant 0 : index
    %14 = vector.load %arg4[%c2, %c0_11, %c0_12] : memref<3x8x8xf32, #tpu.memory_space<vmem>>, vector<1x8x8xf32>
    %15 = vector.shape_cast %14 : vector<1x8x8xf32> to vector<8x8xf32>
    %16 = vector.extract_strided_slice %4 {offsets = [0, 2], sizes = [8, 128], strides = [1, 1]} : vector<8x256xf32> to vector<8x128xf32>
    %cst_13 = arith.constant dense<0.000000e+00> : vector<8x128xf32>
    %17 = tpu.matmul %15, %16, %cst_13 {dimension_numbers = #tpu.dot_dimension_numbers<[1], [0], [0], [1], [0, 0, 1, 1], [], []>} : vector<8x8xf32>, vector<8x128xf32>, vector<8x128xf32> -> vector<8x128xf32>
    %18 = arith.addf %13, %17 : vector<8x128xf32>
    %c0_14 = arith.constant 0 : index
    %c0_15 = arith.constant 0 : index
    %19 = vector.load %arg5[%c0_14, %c0_15] : memref<8x1xf32, #tpu.memory_space<vmem>>, vector<8x1xf32>
    %20 = vector.broadcast %19 : vector<8x1xf32> to vector<8x128xf32>
    %21 = arith.addf %18, %20 : vector<8x128xf32>
    %c0_16 = arith.constant 0 : index
    %c0_17 = arith.constant 0 : index
    %c0_18 = arith.constant 0 : index
    %22 = vector.load %arg6[%c0_16, %c0_17, %c0_18] : memref<1x8x128xf32, #tpu.memory_space<vmem>>, vector<1x8x128xf32>
    %23 = vector.shape_cast %22 : vector<1x8x128xf32> to vector<8x128xf32>
    %24 = vector.shape_cast %21 : vector<8x128xf32> to vector<1x8x128xf32>
    tpu.vector_store %arg6[%c0_16, %c0_17, %c0_18], %24 {strides = array<i32>} : memref<1x8x128xf32, #tpu.memory_space<vmem>>, vector<1x8x128xf32>,
    return
  }
  func.func @transform_0(%arg0: i32, %arg1: i32) -> (i32, i32, i32) {
    %c0_i32 = arith.constant 0 : i32
    %c0_i32_0 = arith.constant 0 : i32
    return %arg0, %c0_i32, %arg1 : i32, i32, i32
  }
  func.func @transform_1(%arg0: i32, %arg1: i32) -> (i32, i32, i32) {
    %c1_i32 = arith.constant 1 : i32
    %0 = arith.addi %arg1, %c1_i32 : i32
    %c1_i32_0 = arith.constant 1 : i32
    %1 = arith.muli %0, %c1_i32_0 : i32
    %c0_i32 = arith.constant 0 : i32
    %c0_i32_1 = arith.constant 0 : i32
    return %arg0, %c0_i32, %1 : i32, i32, i32
  }
  func.func @transform_2(%arg0: i32, %arg1: i32) -> (i32, i32, i32) {
    %c0_i32 = arith.constant 0 : i32
    %c0_i32_0 = arith.constant 0 : i32
    %c0_i32_1 = arith.constant 0 : i32
    %c0_i32_2 = arith.constant 0 : i32
    return %c0_i32, %c0_i32_0, %c0_i32_1 : i32, i32, i32
  }
  func.func @transform_3(%arg0: i32, %arg1: i32) -> (i32, i32) {
    %c0_i32 = arith.constant 0 : i32
    %c0_i32_0 = arith.constant 0 : i32
    %c0_i32_1 = arith.constant 0 : i32
    return %c0_i32, %c0_i32_0 : i32, i32
  }
  func.func @transform_4(%arg0: i32, %arg1: i32) -> (i32, i32, i32) {
    %c0_i32 = arith.constant 0 : i32
    %c0_i32_0 = arith.constant 0 : i32
    return %arg0, %c0_i32, %arg1 : i32, i32, i32
  }
}

</mosaic_0001>

<llo_original>
// kernel: tpu_custom_call.1
$region0: #{tpu_custom_call.1}
  #allocation0 [shape = 'u32[]', space=smem, size = 0x4, offset = 0x4, fixed_abs, tag = 'smem constant byte address 0x4 - core index']
  #allocation1 [shape = 'u32[72,128]{1,0:T(1,128)}', space=vmem, size = 0x9000, scoped, tag = 'internal scratch']
  %s0 = inlined_call_operand.hbm [shape: f32[2,8,256], index: 0, kind: input, shape index: {}]
  %s1 = inlined_call_operand.hbm [shape: f32[2,8,256], index: 1, kind: input, shape index: {}]
  %s2 = inlined_call_operand.hbm [shape: f32[3,8,8], index: 2, kind: input, shape index: {}]
  %s3 = inlined_call_operand.vmem [shape: f32[8,1], index: 3, kind: input, shape index: {}]
  %s4 = inlined_call_operand.hbm [shape: f32[2,8,128], index: 4, kind: output, shape index: {}]
  %s5 = sld [smem:[#allocation0]]
  $region61: #{tpu_custom_call.1} parent=0
    _
  %s7 = ssub.s32 1, %s5
  %s8 = scalar_select 0, %s7, %s5
  $region1: #{tpu_custom_call.1} parent=0
    #allocation2 [shape = 'u8[8192]{0}', space=vmem, size = 0x2000, scoped, tag = 'input window, operand 0']
    #allocation3 [shape = 's32[2]{0}', space=sflag, size = 0x8, scoped, tag = 'scoped memory for tpu_custom_call.1']
    #allocation4 [shape = 's32[2]{0}', space=sflag, size = 0x8, scoped, tag = 'scoped memory for tpu_custom_call.1']
    #allocation5 [shape = 'u8[8192]{0}', space=vmem, size = 0x2000, scoped, tag = 'input window, operand 1']
    #allocation6 [shape = 's32[2]{0}', space=sflag, size = 0x8, scoped, tag = 'scoped memory for tpu_custom_call.1']
    #allocation7 [shape = 'u8[12288]{0}', space=vmem, size = 0x3000, scoped, tag = 'input window, operand 2, single buffered']
    #allocation8 [shape = 'u8[8192]{0}', space=vmem, size = 0x2000, scoped, tag = 'output window, operand 0']
    %9 = vsyncpa [#allocation3], 0
    %s10 = scalar_lea.sflag [#allocation3], 1
    %11 = vsyncpa %s10, 0
    %12 = vsyncpa [#allocation6], 0
    %s13 = scalar_lea.sflag [#allocation6], 1
    %14 = vsyncpa %s13, 0
    %15 = vsyncpa [#allocation4], 0
    %s16 = scalar_lea.sflag [#allocation4], 1
    %17 = vsyncpa %s16, 0
    loop: start=0, step=1, limit=4
    $region2: #{tpu_custom_call.1} parent=1 // loop_pre_header
      _
    $region3: #{tpu_custom_call.1} parent=1 // loop_header
      %s19 = sphi 0, %s23
      %p20 = scmp.ge.s32.totalorder %s19, 4
      %s26 = sphi 0, %s38
      %s27 = sphi 0, %s34
      %s28 = sphi 0, %s26
      %s29 = sphi 0, %s27
      %s30 = sphi 0, %s28
      %s31 = sphi 0, %s29
      %s43 = sphi 0, %s45
      %s46 = sphi 0, %s43
      %s47 = sphi 0, %s46
      %s63 = sphi 0, %s47
      %s73 = sphi 0, %s75
      %s76 = sphi 0, %s73
      %s77 = sphi 0, %s76
      %s93 = sphi 0, %s77
      %s97 = sphi 0, %s97
      %s99 = sphi 0, %s97
      %s100 = sphi 0, %s99
      %s114 = sphi 0, %s100
      %s118 = sphi 0, %s118
      %s120 = sphi 0, %s118
      %s121 = sphi 0, %s120
      %s135 = sphi 0, %s121
      %s143 = sphi 0, %s145
      %s146 = sphi 0, %s143
      %s147 = sphi 0, %s146
      %s163 = sphi 0, %s147
    $region4: #{tpu_custom_call.1} parent=1 // loop_header_branch
      %22 = sbr.rel (%p20) target = $region8
    $region5: #{tpu_custom_call.1} parent=1 // loop_body
      %s24 = ssub.s32 %s19, 1
      %s25 = ssub.s32 %s19, 2
      %s32 = sadd.s32 1, %s27
      %p33 = scmp.ge.s32.totalorder %s32, 1
      %s34 = scalar_select %p33, 0, %s32
      %s35 = sadd.s32 1, %s26
      %s36 = scalar_select %p33, %s35, %s26
      %p37 = scmp.ge.s32.totalorder %s36, 2
      %s38 = scalar_select %p37, 0, %s36
      %s39 = ssub.s32 %s26, %s38
      %s40 = ssub.s32 %s27, %s34
      %s41 = sor.u32 %s39, %s40
      %p42 = scmp.eq.s32.totalorder %s41, 0
      %s44 = sadd.s32 %s43, 1
      %s45 = scalar_select %p42, %s43, %s44
      %p48 = pneg %p42
      %p49 = scmp.eq.s32.totalorder %s19, 1
      %p50 = por %p48, %p49
      %p51 = scmp.ne.s32.totalorder %s43, %s46
      %p52 = scmp.eq.s32.totalorder %s19, 0
      %p53 = por %p51, %p52
      %p54 = scmp.ne.s32.totalorder %s43, %s46
      %p55 = scmp.eq.s32.totalorder %s24, 1
      %p56 = por %p54, %p55
      %p57 = scmp.ne.s32.totalorder %s46, %s47
      %p58 = scmp.eq.s32.totalorder %s24, 0
      %p59 = por %p57, %p58
      %p60 = scmp.ne.s32.totalorder %s46, %s47
      %p61 = scmp.eq.s32.totalorder %s25, 1
      %p62 = por %p60, %p61
      %p64 = scmp.ne.s32.totalorder %s47, %s63
      %p65 = scmp.eq.s32.totalorder %s25, 0
      %p66 = por %p64, %p65
      %s67 = sadd.s32 %s27, 1
      %s68 = sadd.s32 %s34, 1
      %s69 = ssub.s32 %s26, %s38
      %s70 = ssub.s32 %s67, %s68
      %s71 = sor.u32 %s69, %s70
      %p72 = scmp.eq.s32.totalorder %s71, 0
      %s74 = sadd.s32 %s73, 1
      %s75 = scalar_select %p72, %s73, %s74
      %p78 = pneg %p72
      %p79 = scmp.eq.s32.totalorder %s19, 1
      %p80 = por %p78, %p79
      %p81 = scmp.ne.s32.totalorder %s73, %s76
      %p82 = scmp.eq.s32.totalorder %s19, 0
      %p83 = por %p81, %p82
      %p84 = scmp.ne.s32.totalorder %s73, %s76
      %p85 = scmp.eq.s32.totalorder %s24, 1
      %p86 = por %p84, %p85
      %p87 = scmp.ne.s32.totalorder %s76, %s77
      %p88 = scmp.eq.s32.totalorder %s24, 0
      %p89 = por %p87, %p88
      %p90 = scmp.ne.s32.totalorder %s76, %s77
      %p91 = scmp.eq.s32.totalorder %s25, 1
      %p92 = por %p90, %p91
      %p94 = scmp.ne.s32.totalorder %s77, %s93
      %p95 = scmp.eq.s32.totalorder %s25, 0
      %p96 = por %p94, %p95
      %s98 = sadd.s32 %s97, 1
      %p101 = scmp.eq.s32.totalorder %s19, 1
      %p102 = scmp.ne.s32.totalorder %s97, %s99
      %p103 = scmp.eq.s32.totalorder %s19, 0
      %p104 = por %p102, %p103
      %p105 = scmp.ne.s32.totalorder %s97, %s99
      %p106 = scmp.eq.s32.totalorder %s24, 1
      %p107 = por %p105, %p106
      %p108 = scmp.ne.s32.totalorder %s99, %s100
      %p109 = scmp.eq.s32.totalorder %s24, 0
      %p110 = por %p108, %p109
      %p111 = scmp.ne.s32.totalorder %s99, %s100
      %p112 = scmp.eq.s32.totalorder %s25, 1
      %p113 = por %p111, %p112
      %p115 = scmp.ne.s32.totalorder %s100, %s114
      %p116 = scmp.eq.s32.totalorder %s25, 0
      %p117 = por %p115, %p116
      %s119 = sadd.s32 %s118, 1
      %p122 = scmp.eq.s32.totalorder %s19, 1
      %p123 = scmp.ne.s32.totalorder %s118, %s120
      %p124 = scmp.eq.s32.totalorder %s19, 0
      %p125 = por %p123, %p124
      %p126 = scmp.ne.s32.totalorder %s118, %s120
      %p127 = scmp.eq.s32.totalorder %s24, 1
      %p128 = por %p126, %p127
      %p129 = scmp.ne.s32.totalorder %s120, %s121
      %p130 = scmp.eq.s32.totalorder %s24, 0
      %p131 = por %p129, %p130
      %p132 = scmp.ne.s32.totalorder %s120, %s121
      %p133 = scmp.eq.s32.totalorder %s25, 1
      %p134 = por %p132, %p133
      %p136 = scmp.ne.s32.totalorder %s121, %s135
      %p137 = scmp.eq.s32.totalorder %s25, 0
      %p138 = por %p136, %p137
      %s139 = ssub.s32 %s26, %s38
      %s140 = ssub.s32 %s27, %s34
      %s141 = sor.u32 %s139, %s140
      %p142 = scmp.eq.s32.totalorder %s141, 0
      %s144 = sadd.s32 %s143, 1
      %s145 = scalar_select %p142, %s143, %s144
      %p148 = pneg %p142
      %p149 = scmp.eq.s32.totalorder %s19, 1
      %p150 = por %p148, %p149
      %p151 = scmp.ne.s32.totalorder %s143, %s146
      %p152 = scmp.eq.s32.totalorder %s19, 0
      %p153 = por %p151, %p152
      %p154 = scmp.ne.s32.totalorder %s143, %s146
      %p155 = scmp.eq.s32.totalorder %s24, 1
      %p156 = por %p154, %p155
      %p157 = scmp.ne.s32.totalorder %s146, %s147
      %p158 = scmp.eq.s32.totalorder %s24, 0
      %p159 = por %p157, %p158
      %p160 = scmp.ne.s32.totalorder %s146, %s147
      %p161 = scmp.eq.s32.totalorder %s25, 1
      %p162 = por %p160, %p161
      %p164 = scmp.ne.s32.totalorder %s147, %s163
      %p165 = scmp.eq.s32.totalorder %s25, 0
      %p166 = por %p164, %p165
      %p167 = scmp.le.s32.totalorder 1, %s19
      %p168 = scmp.lt.s32.totalorder %s19, 3
      %p169 = pnand %p167, %p168
      %p170 = pneg %p169
      // Predicated region
      $region9: #{tpu_custom_call.1} parent=5 // pred_check
        _
      $region10: #{tpu_custom_call.1} parent=5 // pred_check_branch
        %172 = sbr.rel (%p169) target = $region12
      $region11: #{tpu_custom_call.1} parent=5 // pred_region
        %s173 = ssub.s32 %s19, 1
        // Predicated region
        $region13: #{tpu_custom_call.1} parent=11 // pred_check
          %p174 = pneg %p110
        $region14: #{tpu_custom_call.1} parent=11 // pred_check_branch
          %176 = sbr.rel (%p174) target = $region16
        $region15: #{tpu_custom_call.1} parent=11 // pred_region
          %178 = vsyncadd [#allocation6], 0
          %s179 = sshll.u32 %s2, 4
          %s180 = int_to_ptr.hbm [resolvable:$true] %s179
          %s181 = sshll.u32 [#allocation7], 4
          %s182 = int_to_ptr.vmem [resolvable:$true] %s181
          %187 = dma.hbm_to_vmem [thread:$0]  %s180, 384, %s182, [#allocation6], 128, 128, 8
        $region16: #{tpu_custom_call.1} parent=11 // pred_fallthru
          _
        // Predicated region
        $region17: #{tpu_custom_call.1} parent=11 // pred_check
          %p188 = pneg %p131
        $region18: #{tpu_custom_call.1} parent=11 // pred_check_branch
          %190 = sbr.rel (%p188) target = $region20
        $region19: #{tpu_custom_call.1} parent=11 // pred_region
          _
        $region20: #{tpu_custom_call.1} parent=11 // pred_fallthru
          _
      $region12: #{tpu_custom_call.1} parent=5 // pred_fallthru
        _
      %p191 = scmp.lt.s32.totalorder %s19, 2
      // Predicated region
      $region21: #{tpu_custom_call.1} parent=5 // pred_check
        %p192 = pneg %p191
      $region22: #{tpu_custom_call.1} parent=5 // pred_check_branch
        %194 = sbr.rel (%p192) target = $region24
      $region23: #{tpu_custom_call.1} parent=5 // pred_region
        // Predicated region
        $region25: #{tpu_custom_call.1} parent=23 // pred_check
          %p195 = pneg %p53
        $region26: #{tpu_custom_call.1} parent=23 // pred_check_branch
          %197 = sbr.rel (%p195) target = $region28
        $region27: #{tpu_custom_call.1} parent=23 // pred_region
          %s198 = sand.u32 %s43, 1
          %s199 = scalar_lea.sflag [#allocation3], %s198
          %s200 = sand.u32 %s43, 1
          %s201 = smul.addr %s200, 8
          %s202 = scalar_lea.vmem [#allocation2], %s201
          %204 = vsyncadd %s199, 0
          %s205 = smul.addr %s26, 2
          %s206 = sadd.s32 %s27, %s205
          %s207 = smul.addr %s206, 8
          %s208 = scalar_lea.hbm %s0, %s207
          %s210 = sshll.u32 %s208, 4
          %s211 = int_to_ptr.hbm [resolvable:$true] %s210
          %s212 = sshll.u32 %s202, 4
          %s213 = int_to_ptr.vmem [resolvable:$true] %s212
          %215 = dma.hbm_to_vmem [thread:$0]  %s211, 128, %s213, %s199
        $region28: #{tpu_custom_call.1} parent=23 // pred_fallthru
          _
        // Predicated region
        $region29: #{tpu_custom_call.1} parent=23 // pred_check
          %p216 = pneg %p83
        $region30: #{tpu_custom_call.1} parent=23 // pred_check_branch
          %218 = sbr.rel (%p216) target = $region32
        $region31: #{tpu_custom_call.1} parent=23 // pred_region
          %s219 = sand.u32 %s19, 1
          %s220 = scalar_lea.sflag [#allocation6], %s219
          %s221 = sand.u32 %s73, 1
          %s222 = smul.addr %s221, 8
          %s223 = scalar_lea.vmem [#allocation5], %s222
          %s224 = sadd.s32 %s27, 1
          %226 = vsyncadd %s220, 0
          %s227 = smul.addr %s26, 2
          %s228 = sadd.s32 %s224, %s227
          %s229 = smul.addr %s228, 8
          %s230 = scalar_lea.hbm %s1, %s229
          %s232 = sshll.u32 %s230, 4
          %s233 = int_to_ptr.hbm [resolvable:$true] %s232
          %s234 = sshll.u32 %s223, 4
          %s235 = int_to_ptr.vmem [resolvable:$true] %s234
          %237 = dma.hbm_to_vmem [thread:$0]  %s233, 128, %s235, %s220
        $region32: #{tpu_custom_call.1} parent=23 // pred_fallthru
          _
      $region24: #{tpu_custom_call.1} parent=5 // pred_fallthru
        _
      %p238 = scmp.le.s32.totalorder 1, %s19
      %p239 = scmp.lt.s32.totalorder %s19, 3
      %p240 = pnand %p238, %p239
      %p241 = pneg %p240
      // Predicated region
      $region33: #{tpu_custom_call.1} parent=5 // pred_check
        _
      $region34: #{tpu_custom_call.1} parent=5 // pred_check_branch
        %243 = sbr.rel (%p240) target = $region36
      $region35: #{tpu_custom_call.1} parent=5 // pred_region
        %s244 = ssub.s32 %s19, 1
        %s245 = sand.u32 %s46, 1
        %s246 = scalar_lea.sflag [#allocation3], %s245
        %s247 = sand.u32 %s46, 1
        %s248 = smul.addr %s247, 8
        %s249 = scalar_lea.vmem [#allocation2], %s248
        // Predicated region
        $region37: #{tpu_custom_call.1} parent=35 // pred_check
          %p250 = pneg %p59
        $region38: #{tpu_custom_call.1} parent=35 // pred_check_branch
          %252 = sbr.rel (%p250) target = $region40
        $region39: #{tpu_custom_call.1} parent=35 // pred_region
          %254 = dma.done %s246, 128
        $region40: #{tpu_custom_call.1} parent=35 // pred_fallthru
          _
        %s255 = sand.u32 %s24, 1
        %s256 = scalar_lea.sflag [#allocation6], %s255
        %s257 = sand.u32 %s76, 1
        %s258 = smul.addr %s257, 8
        %s259 = scalar_lea.vmem [#allocation5], %s258
        // Predicated region
        $region41: #{tpu_custom_call.1} parent=35 // pred_check
          %p260 = pneg %p89
        $region42: #{tpu_custom_call.1} parent=35 // pred_check_branch
          %262 = sbr.rel (%p260) target = $region44
        $region43: #{tpu_custom_call.1} parent=35 // pred_region
          %264 = dma.done %s256, 128
        $region44: #{tpu_custom_call.1} parent=35 // pred_fallthru
          _
        // Predicated region
        $region45: #{tpu_custom_call.1} parent=35 // pred_check
          %p265 = pneg %p110
        $region46: #{tpu_custom_call.1} parent=35 // pred_check_branch
          %267 = sbr.rel (%p265) target = $region48
        $region47: #{tpu_custom_call.1} parent=35 // pred_region
          %269 = dma.done [#allocation6], 384
        $region48: #{tpu_custom_call.1} parent=35 // pred_fallthru
          _
        %s270 = sand.u32 %s46, 1
        %s271 = scalar_lea.sflag [#allocation3], %s270
        %s272 = sand.u32 %s46, 1
        %s273 = smul.addr %s272, 8
        %s274 = scalar_lea.vmem [#allocation2], %s273
        %p275 = pneg %p59
        %p276 = pneg %p56
        %s277 = sand.u32 %s24, 1
        %s278 = scalar_lea.sflag [#allocation6], %s277
        %s279 = sand.u32 %s76, 1
        %s280 = smul.addr %s279, 8
        %s281 = scalar_lea.vmem [#allocation5], %s280
        %p282 = pneg %p89
        %p283 = pneg %p86
        %p284 = pneg %p110
        %p285 = pneg %p107
        %p286 = pneg %p131
        %p287 = pneg %p128
        %p288 = pneg %p159
        %p289 = pneg %p156
        %s290 = sand.u32 %s146, 1
        %s291 = scalar_lea.sflag [#allocation4], %s290
        %s292 = sand.u32 %s146, 1
        %s293 = smul.addr %s292, 8
        %s294 = scalar_lea.vmem [#allocation8], %s293
        %s295 = sadd.s32 %s29, 1
        %v296 = vld [vmem:[%s249] sm:$0xff]
        %v297 = vld [vmem:[%s259] sm:$0xff]
        %v298 = vld [vmem:[#allocation7] sm:$0xff]
        %s299 = scalar_lea.vmem [#allocation7], 8
        %v300 = vld [vmem:[%s299] sm:$0xff]
        %303 = vrot.lane.b32.xlu0 %v296, 127
        %v304 = vpop.permute.xlu0 %303
        %305 = vrot.lane.b32.xlu0 %v297, 127
        %v306 = vpop.permute.xlu0 %305
        %vm307 = vcmask 1039360
        %v308 = vsel %vm307, %v304, %v306
        %vm310 = vcmask 64512
        %v312 = vsel %vm310, %v300, 0
        %314 = vmatpush.msra.mxu0 0.0
        %315 = vmatpush.msra.mxu0 0.0
        %316 = vmatpush.msra.mxu0 0.0
        %317 = vmatpush.msra.mxu0 0.0
        %318 = vmatpush.msra.mxu0 0.0
        %319 = vmatpush.msra.mxu0 0.0
        %320 = vmatpush.msra.mxu0 0.0
        %321 = vmatpush.msra.mxu0 0.0
        %322 = vmatpush.msra.mxu0 0.0
        %323 = vmatpush.msra.mxu0 0.0
        %324 = vmatpush.msra.mxu0 0.0
        %325 = vmatpush.msra.mxu0 0.0
        %326 = vmatpush.msra.mxu0 0.0
        %327 = vmatpush.msra.mxu0 0.0
        %328 = vmatpush.msra.mxu0 0.0
        %329 = vmatpush.msra.mxu0 %v308
        %330 = vmatmul.f32.gmra.mxu0 %v312
        %v331 = vpop.f32.mrf.mxu0
        %v332 = vadd.f32 0.0, %v331
        %333 = vdwg.mxu0
        %v335 = vsel %vm310, %v298, 0
        %337 = vmatpush.msra.mxu0 0.0
        %338 = vmatpush.msra.mxu0 0.0
        %339 = vmatpush.msra.mxu0 0.0
        %340 = vmatpush.msra.mxu0 0.0
        %341 = vmatpush.msra.mxu0 0.0
        %342 = vmatpush.msra.mxu0 0.0
        %343 = vmatpush.msra.mxu0 0.0
        %344 = vmatpush.msra.mxu0 0.0
        %345 = vmatpush.msra.mxu0 0.0
        %346 = vmatpush.msra.mxu0 0.0
        %347 = vmatpush.msra.mxu0 0.0
        %348 = vmatpush.msra.mxu0 0.0
        %349 = vmatpush.msra.mxu0 0.0
        %350 = vmatpush.msra.mxu0 0.0
        %351 = vmatpush.msra.mxu0 0.0
        %352 = vmatpush.msra.mxu0 %v296
        %353 = vmatmul.f32.gmra.mxu0 %v335
        %v354 = vpop.f32.mrf.mxu0
        %v355 = vadd.f32 %v332, %v354
        %356 = vdwg.mxu0
        %s357 = scalar_lea.vmem [#allocation7], 16
        %v358 = vld [vmem:[%s357] sm:$0xff]
        %359 = vrot.lane.b32.xlu0 %v296, 126
        %v360 = vpop.permute.xlu0 %359
        %361 = vrot.lane.b32.xlu0 %v297, 126
        %v362 = vpop.permute.xlu0 %361
        %vm363 = vcmask 1031168
        %v364 = vsel %vm363, %v360, %v362
        %v367 = vsel %vm310, %v358, 0
        %369 = vmatpush.msra.mxu0 0.0
        %370 = vmatpush.msra.mxu0 0.0
        %371 = vmatpush.msra.mxu0 0.0
        %372 = vmatpush.msra.mxu0 0.0
        %373 = vmatpush.msra.mxu0 0.0
        %374 = vmatpush.msra.mxu0 0.0
        %375 = vmatpush.msra.mxu0 0.0
        %376 = vmatpush.msra.mxu0 0.0
        %377 = vmatpush.msra.mxu0 0.0
        %378 = vmatpush.msra.mxu0 0.0
        %379 = vmatpush.msra.mxu0 0.0
        %380 = vmatpush.msra.mxu0 0.0
        %381 = vmatpush.msra.mxu0 0.0
        %382 = vmatpush.msra.mxu0 0.0
        %383 = vmatpush.msra.mxu0 0.0
        %384 = vmatpush.msra.mxu0 %v364
        %385 = vmatmul.f32.gmra.mxu0 %v367
        %v386 = vpop.f32.mrf.mxu0
        %v387 = vadd.f32 0.0, %v386
        %388 = vdwg.mxu0
        %v389 = vadd.f32 %v355, %v387
        %v390 = vld [vmem:[%s3] sm:$0xff]
        %392 = vset.pattern.permute.xlu0 0
        %393 = vperm.xlu0 %392, %v390
        %v394 = vpop.permute.xlu0 %393
        %v396 = vadd.f32 %v389, %v394
        %397 = vst [vmem:[%s294] sm:$0xff] %v396
        %s398 = sand.u32 %s146, 1
        %s399 = scalar_lea.sflag [#allocation4], %s398
        %s400 = sand.u32 %s146, 1
        %s401 = smul.addr %s400, 8
        %s402 = scalar_lea.vmem [#allocation8], %s401
        // Predicated region
        $region49: #{tpu_custom_call.1} parent=35 // pred_check
          %p403 = pneg %p156
        $region50: #{tpu_custom_call.1} parent=35 // pred_check_branch
          %405 = sbr.rel (%p403) target = $region52
        $region51: #{tpu_custom_call.1} parent=35 // pred_region
          %407 = vsyncadd %s399, 0
          %s408 = sadd.s32 %s29, %s28
          %s409 = smul.addr %s408, 8
          %s410 = scalar_lea.hbm %s4, %s409
          %s412 = sshll.u32 %s402, 4
          %s413 = int_to_ptr.vmem [resolvable:$true] %s412
          %s414 = sshll.u32 %s410, 4
          %s415 = int_to_ptr.hbm [resolvable:$true] %s414
          %417 = dma.vmem_to_hbm [thread:$0]  %s413, 128, %s415, %s399
        $region52: #{tpu_custom_call.1} parent=35 // pred_fallthru
          _
      $region36: #{tpu_custom_call.1} parent=5 // pred_fallthru
        _
      %p418 = scmp.le.s32.totalorder 2, %s19
      // Predicated region
      $region53: #{tpu_custom_call.1} parent=5 // pred_check
        %p419 = pneg %p418
      $region54: #{tpu_custom_call.1} parent=5 // pred_check_branch
        %421 = sbr.rel (%p419) target = $region56
      $region55: #{tpu_custom_call.1} parent=5 // pred_region
        %s422 = ssub.s32 %s19, 2
        // Predicated region
        $region57: #{tpu_custom_call.1} parent=55 // pred_check
          %p423 = pneg %p162
        $region58: #{tpu_custom_call.1} parent=55 // pred_check_branch
          %425 = sbr.rel (%p423) target = $region60
        $region59: #{tpu_custom_call.1} parent=55 // pred_region
          %s426 = sand.u32 %s147, 1
          %s427 = scalar_lea.sflag [#allocation4], %s426
          %s428 = sand.u32 %s147, 1
          %s429 = smul.addr %s428, 8
          %s430 = scalar_lea.vmem [#allocation8], %s429
          %432 = dma.done %s427, 128
        $region60: #{tpu_custom_call.1} parent=55 // pred_fallthru
          _
      $region56: #{tpu_custom_call.1} parent=5 // pred_fallthru
        _
    $region6: #{tpu_custom_call.1} parent=1 // loop_footer
      %s23 = sadd.s32 1, %s19
    $region7: #{tpu_custom_call.1} parent=1 // loop_footer_branch
      %18 = sbr.rel target = $region3
    $region8: #{tpu_custom_call.1} parent=1 // loop_exit
      _
    %433 = vsyncpa [#allocation3], 1
    %s434 = scalar_lea.sflag [#allocation3], 1
    %435 = vsyncpa %s434, 1
    %436 = vsyncpa [#allocation6], 1
    %s437 = scalar_lea.sflag [#allocation6], 1
    %438 = vsyncpa %s437, 1
    %439 = vsyncpa [#allocation4], 1
    %s440 = scalar_lea.sflag [#allocation4], 1
    %441 = vsyncpa %s440, 1

</llo_original>
